<compile_context>
chip_gen: v7x
topology: tpu7x:2x2x1
jax: 0.10.0
libtpu: 0.0.40
codegen_flags: <defaults>
</compile_context>

<pallas_src>
import jax
import jax.numpy as jnp
from jax.experimental import pallas as pl
from jax.experimental.pallas import tpu as pltpu


# Model constants (GNNCritic1(in_channels=4, hidden_size=32, act_dim=6) demo sizes).
IN_CHANNELS = 4
HIDDEN = 32

# Packed-parameter slab layout (row offsets; every block starts on an 8-row
# boundary so all in-kernel static slices are sublane-aligned).  Width = HIDDEN.
WC_OFF = 0                       # conv weight              [C, C]
BC_OFF = 8                       # conv bias                [1, C]
W1_OFF = 16                      # lin1 weight              [C, H]
B1_OFF = 24                      # lin1 bias                [1, H]
W2_OFF = 32                      # lin2 weight              [H, H]
B2_OFF = 64                      # lin2 bias                [1, H]
W3_OFF = 72                      # lin3 weight (transposed) [1, H]
B3_OFF = 80                      # lin3 bias                [1, 1]
PARAM_ROWS = 88


def _round_up(x, m):
    return ((x + m - 1) // m) * m


def _vpu_matmul(a, b):
    """a[M, K] @ b[K, N] for tiny static K as a TREE of rank-1 VPU updates.

    At K=4/K=12 the MXU would be >96% idle; a handful of broadcast mul/adds on
    the VPU is cheaper and frees the MXU slot.  The partial products are
    pairwise-summed so the serialized add depth is ceil(log2(K)) instead of K.
    """
    k_dim = a.shape[1]
    parts = [a[:, k:k + 1] * b[k:k + 1, :] for k in range(k_dim)]
    while len(parts) > 1:
        nxt = [parts[i] + parts[i + 1] for i in range(0, len(parts) - 1, 2)]
        if len(parts) % 2:
            nxt.append(parts[-1])
        parts = nxt
    return parts[0]


# ----------------------------------------------------------------------------
# Stage 1: per-graph GCNConv + residual + action-weighted readout.
# One grid step per graph; writes pooled features [b_pad, C].
# ----------------------------------------------------------------------------
def _make_stage1_kernel(n, c, b_pad, a_off, x_off, p_off):
    def kernel(in_ref, params_ref, pooled_ref):
        a = in_ref[a_off:a_off + n, 0:n]                       # [N, N] normalized adj
        x0 = in_ref[x_off:x_off + n, 0:c]                      # [N, C] node features
        p = in_ref[p_off:p_off + b_pad, 0:n]                   # [b_pad, N] scaled pooling

        wc = params_ref[WC_OFF:WC_OFF + c, 0:c]                # [C, C]
        bc = params_ref[BC_OFF:BC_OFF + 1, 0:c]                # [1, C]

        # GCNConv: A_norm @ (X @ Wc) + bc, ReLU, residual.  Tiny-K -> VPU tree.
        # TODO(synk): on v7x (MRB removes the FIFO push->pop serialization)
        # re-benchmark jnp.dot for the K=N contractions vs. this VPU tree.
        xw = _vpu_matmul(x0, wc)                               # [N, C]
        h = _vpu_matmul(a, xw)                                 # [N, C]
        x = jnp.maximum(h + bc, 0.0) + x0                      # [N, C]

        # Action-weighted readout: pool rows already carry the 10*action scale.
        pooled_ref[...] = _vpu_matmul(p, x)                    # [b_pad, C]
    return kernel


# ----------------------------------------------------------------------------
# Stage 2: MLP head, run ONCE over the whole [G*b_pad, C] pooled batch.
# ----------------------------------------------------------------------------
def _make_stage2_kernel(c, h_dim):
    def kernel(pooled_ref, params_ref, out_ref):
        x = pooled_ref[...]                                    # [R, C]

        w1 = params_ref[W1_OFF:W1_OFF + c, 0:h_dim]            # [C, H]
        b1 = params_ref[B1_OFF:B1_OFF + 1, 0:h_dim]            # [1, H]
        w2 = params_ref[W2_OFF:W2_OFF + h_dim, 0:h_dim]        # [H, H]
        b2 = params_ref[B2_OFF:B2_OFF + 1, 0:h_dim]            # [1, H]
        w3t = params_ref[W3_OFF:W3_OFF + 1, 0:h_dim]           # [1, H]
        b3 = params_ref[B3_OFF:B3_OFF + 1, 0:1]                # [1, 1]

        x = jnp.maximum(_vpu_matmul(x, w1) + b1, 0.0)          # [R, H]  (K=C -> VPU)
        x = jnp.maximum(
            jnp.dot(x, w2, preferred_element_type=jnp.float32) + b2, 0.0)  # [R, H] (MXU)
        q = jnp.sum(x * w3t, axis=-1, keepdims=True) + b3      # [R, 1]  (lane reduce)

        # Lane-dense, full-tile store: broadcast scalar column across 128 lanes.
        out_ref[...] = jnp.broadcast_to(q, out_ref.shape)
    return kernel


# ----------------------------------------------------------------------------
# Wrapper glue
# ----------------------------------------------------------------------------
def pack_params(params):
    """Pack all weights/biases into one lane-dense f32 slab (single DMA)."""
    C, H = IN_CHANNELS, HIDDEN
    slab = jnp.zeros((PARAM_ROWS, H), jnp.float32)
    slab = slab.at[WC_OFF:WC_OFF + C, 0:C].set(params["wc"])
    slab = slab.at[BC_OFF, 0:C].set(params["bc"][0])
    slab = slab.at[W1_OFF:W1_OFF + C, 0:H].set(params["w1"])
    slab = slab.at[B1_OFF, 0:H].set(params["b1"][0])
    slab = slab.at[W2_OFF:W2_OFF + H, 0:H].set(params["w2"])
    slab = slab.at[B2_OFF, 0:H].set(params["b2"][0])
    slab = slab.at[W3_OFF, 0:H].set(params["w3"][:, 0])
    slab = slab.at[B3_OFF, 0].set(params["b3"][0, 0])
    return slab


def gnn_critic1_forward(state, a_norm, pool_scaled, param_slab):
    """Batched forward over a stack of graphs.

    state:       [G, N, C]  node features per graph
    a_norm:      [G, N, N]  symmetric-normalized adjacency per graph
    pool_scaled: [G, B, N]  pooling matrix with the 10*action scale folded in
    Returns q-values [G, B].
    """
    G, N, C = state.shape
    B = pool_scaled.shape[1]
    H = HIDDEN
    b_pad = _round_up(B, 8)
    n_pad = _round_up(N, 8)
    w_in = max(N, C)
    a_off, x_off, p_off = 0, n_pad, 2 * n_pad
    in_rows = 2 * n_pad + b_pad
    R = G * b_pad
    vmem_cap = 32 * 1024 * 1024   # well under v7x's 64 MiB physical / all defaults

    # Pack per-graph inputs into one 8-row-aligned slab -> 1 DMA per grid step.
    in_slab = jnp.zeros((G, in_rows, w_in), jnp.float32)
    in_slab = in_slab.at[:, a_off:a_off + N, 0:N].set(a_norm)
    in_slab = in_slab.at[:, x_off:x_off + N, 0:C].set(state)
    in_slab = in_slab.at[:, p_off:p_off + B, 0:N].set(pool_scaled)

    # --- Stage 1: grid over graphs (parallel -> both v7x TensorCores). ------
    flops1 = int(2 * G * (N * C * C + N * N * C + b_pad * N * C))
    bytes1 = int(4 * (G * in_rows * w_in + PARAM_ROWS * H + R * C))
    pooled = pl.pallas_call(
        _make_stage1_kernel(N, C, b_pad, a_off, x_off, p_off),
        out_shape=jax.ShapeDtypeStruct((R, C), jnp.float32),
        grid=(G,),
        in_specs=[
            pl.BlockSpec((None, in_rows, w_in), lambda g: (g, 0, 0)),
            # Constant block index -> the 11 KiB param slab is DMA'd once.
            pl.BlockSpec((PARAM_ROWS, H), lambda g: (0, 0)),
        ],
        out_specs=pl.BlockSpec((b_pad, C), lambda g: (g, 0)),
        compiler_params=pltpu.CompilerParams(
            dimension_semantics=("parallel",),
            vmem_limit_bytes=vmem_cap),
        cost_estimate=pl.CostEstimate(
            flops=flops1, transcendentals=0, bytes_accessed=bytes1),
    )(in_slab, param_slab)

    # --- Stage 2: batched MLP head (one MXU-shaped matmul for all graphs). ---
    # TODO(synk): tile this over a row grid if G*b_pad grows beyond a few K rows.
    flops2 = int(2 * R * (C * H + H * H + H))
    bytes2 = int(4 * (R * C + PARAM_ROWS * H + R * 128))
    vmem = pl.BlockSpec(memory_space=pltpu.MemorySpace.VMEM)
    out = pl.pallas_call(
        _make_stage2_kernel(C, H),
        out_shape=jax.ShapeDtypeStruct((R, 128), jnp.float32),
        in_specs=[vmem, vmem],
        out_specs=vmem,
        compiler_params=pltpu.CompilerParams(vmem_limit_bytes=vmem_cap),
        cost_estimate=pl.CostEstimate(
            flops=flops2, transcendentals=0, bytes_accessed=bytes2),
    )(pooled, param_slab)

    return out.reshape(G, b_pad, 128)[:, :B, 0]                 # [G, B]


# ----------------------------------------------------------------------------
# Glue: edge_index -> dense symmetric-normalized adjacency (GCNConv semantics,
# add_self_loops=True, normalize=True, edge weights = 1).
# NOTE: degree is computed on the dst axis; this matches PyG GCNConv exactly
# for undirected (symmetric) edge_index, which is what the demo uses.
# ----------------------------------------------------------------------------
def gcn_dense_norm_adj(edge_index, num_nodes):
    src, dst = edge_index[0], edge_index[1]
    loops = jnp.arange(num_nodes, dtype=edge_index.dtype)
    src = jnp.concatenate([src, loops])
    dst = jnp.concatenate([dst, loops])
    a = jnp.zeros((num_nodes, num_nodes), jnp.float32).at[dst, src].add(1.0)
    deg = a.sum(axis=1)
    d_inv_sqrt = jnp.where(deg > 0, 1.0 / jnp.sqrt(deg), 0.0)
    return d_inv_sqrt[:, None] * a * d_inv_sqrt[None, :]


# ----------------------------------------------------------------------------
# Pure-JAX reference (mirrors the PyTorch forward) for correctness check.
# ----------------------------------------------------------------------------
def reference_forward(state, a_norm, action, params, act_dim, in_channels):
    h = jnp.maximum(a_norm @ (state @ params["wc"]) + params["bc"][0], 0.0)
    x = h + state
    x = x.reshape(-1, act_dim, in_channels)
    a = (action * 10.0)[..., None]
    x = (x * a).sum(axis=1)
    x = jnp.maximum(x @ params["w1"] + params["b1"][0], 0.0)
    x = jnp.maximum(x @ params["w2"] + params["b2"][0], 0.0)
    return (x @ params["w3"] + params["b3"][0])[:, 0]


if __name__ == "__main__":
    in_channels = IN_CHANNELS
    hidden_size = HIDDEN
    act_dim = 6
    batch = 2
    num_graphs = 4                        # stacked graph instances (grid axis)
    num_nodes = batch * act_dim           # state rows reshape to [batch, act_dim, C]

    key = jax.random.PRNGKey(0)
    ks = jax.random.split(key, 12)

    # Deterministic synthetic parameters (shapes from the module __init__).
    params = {
        "wc": 0.1 * jax.random.normal(ks[0], (in_channels, in_channels), jnp.float32),
        "bc": 0.1 * jax.random.normal(ks[1], (1, in_channels), jnp.float32),
        "w1": 0.1 * jax.random.normal(ks[2], (in_channels, hidden_size), jnp.float32),
        "b1": 0.1 * jax.random.normal(ks[3], (1, hidden_size), jnp.float32),
        "w2": 0.1 * jax.random.normal(ks[4], (hidden_size, hidden_size), jnp.float32),
        "b2": 0.1 * jax.random.normal(ks[5], (1, hidden_size), jnp.float32),
        "w3": 0.1 * jax.random.normal(ks[6], (hidden_size, 1), jnp.float32),
        "b3": 0.1 * jax.random.normal(ks[7], (1, 1), jnp.float32),
    }

    # Inputs: stacked node features, ring-graph edge_index (undirected), actions.
    state = jax.random.normal(
        ks[8], (num_graphs, num_nodes, in_channels), jnp.float32)
    idx = jnp.arange(num_nodes, dtype=jnp.int32)
    edge_index = jnp.stack([
        jnp.concatenate([idx, (idx + 1) % num_nodes]),
        jnp.concatenate([(idx + 1) % num_nodes, idx]),
    ])                                                            # [2, 2N]
    action = jax.random.uniform(
        ks[9], (num_graphs, batch, act_dim), jnp.float32)

    # Glue: dense normalized adjacency, action-scaled pooling, packed params.
    a_norm_one = gcn_dense_norm_adj(edge_index, num_nodes)        # [N, N]
    a_norm = jnp.broadcast_to(
        a_norm_one, (num_graphs, num_nodes, num_nodes))           # [G, N, N]
    pool = (jnp.arange(num_nodes)[None, :] // act_dim ==
            jnp.arange(batch)[:, None]).astype(jnp.float32)       # [B, N]
    pool_scaled = pool[None, :, :] * (
        10.0 * action.reshape(num_graphs, -1))[:, None, :]        # [G, B, N]
    param_slab = pack_params(params)                              # [88, 32]

    out = gnn_critic1_forward(state, a_norm, pool_scaled, param_slab)
    out = jax.block_until_ready(out)

    ref = jnp.stack([
        reference_forward(state[g], a_norm[g], action[g], params,
                          act_dim, in_channels)
        for g in range(num_graphs)])                              # [G, B]

    assert out.shape == (num_graphs, batch)
    assert jnp.allclose(out, ref, atol=1e-4, rtol=1e-4), (out, ref)

    print("KERNEL_OK")
</pallas_src>

<mosaic_0001>
module attributes {stable_mosaic.version = 11 : i64} {
  func.func @kernel(%arg0: i32, %arg1: memref<1x40x12xf32, #tpu.memory_space<vmem>>, %arg2: memref<88x32xf32, #tpu.memory_space<vmem>>, %arg3: memref<8x4xf32, #tpu.memory_space<vmem>>) attributes {dimension_semantics = [#tpu.dimension_semantics<parallel>], iteration_bounds = array<i64: 4>, scalar_prefetch = 0 : i64, scratch_operands = 0 : i64, tpu.core_type = #tpu.core_type<tc>, window_params = [{transform_indices = @transform_0, window_bounds = array<i64: 1, 40, 12>}, {pipeline_mode = #tpu.pipeline_mode<synchronous>, transform_indices = @transform_1, window_bounds = array<i64: 88, 32>}, {transform_indices = @transform_2, window_bounds = array<i64: 8, 4>}]} {
    %c0 = arith.constant 0 : index
    %c0_0 = arith.constant 0 : index
    %c0_1 = arith.constant 0 : index
    %0 = vector.load %arg1[%c0, %c0_0, %c0_1] : memref<1x40x12xf32, #tpu.memory_space<vmem>>, vector<1x12x12xf32>
    %1 = vector.shape_cast %0 : vector<1x12x12xf32> to vector<12x12xf32>
    %c0_2 = arith.constant 0 : index
    %c16 = arith.constant 16 : index
    %c0_3 = arith.constant 0 : index
    %2 = vector.load %arg1[%c0_2, %c16, %c0_3] : memref<1x40x12xf32, #tpu.memory_space<vmem>>, vector<1x12x4xf32>
    %3 = vector.shape_cast %2 : vector<1x12x4xf32> to vector<12x4xf32>
    %c0_4 = arith.constant 0 : index
    %c32 = arith.constant 32 : index
    %c0_5 = arith.constant 0 : index
    %4 = vector.load %arg1[%c0_4, %c32, %c0_5] : memref<1x40x12xf32, #tpu.memory_space<vmem>>, vector<1x8x12xf32>
    %5 = vector.shape_cast %4 : vector<1x8x12xf32> to vector<8x12xf32>
    %c0_6 = arith.constant 0 : index
    %c0_7 = arith.constant 0 : index
    %6 = vector.load %arg2[%c0_6, %c0_7] : memref<88x32xf32, #tpu.memory_space<vmem>>, vector<4x4xf32>
    %c8 = arith.constant 8 : index
    %c0_8 = arith.constant 0 : index
    %7 = vector.load %arg2[%c8, %c0_8] : memref<88x32xf32, #tpu.memory_space<vmem>>, vector<1x4xf32>
    %8 = vector.extract_strided_slice %3 {offsets = [0, 0], sizes = [12, 1], strides = [1, 1]} : vector<12x4xf32> to vector<12x1xf32>
    %9 = vector.extract_strided_slice %6 {offsets = [0, 0], sizes = [1, 4], strides = [1, 1]} : vector<4x4xf32> to vector<1x4xf32>
    %10 = vector.broadcast %8 : vector<12x1xf32> to vector<12x4xf32>
    %11 = vector.broadcast %9 : vector<1x4xf32> to vector<12x4xf32>
    %12 = arith.mulf %10, %11 : vector<12x4xf32>
    %13 = vector.extract_strided_slice %3 {offsets = [0, 1], sizes = [12, 1], strides = [1, 1]} : vector<12x4xf32> to vector<12x1xf32>
    %14 = vector.extract_strided_slice %6 {offsets = [1, 0], sizes = [1, 4], strides = [1, 1]} : vector<4x4xf32> to vector<1x4xf32>
    %15 = vector.broadcast %13 : vector<12x1xf32> to vector<12x4xf32>
    %16 = vector.broadcast %14 : vector<1x4xf32> to vector<12x4xf32>
    %17 = arith.mulf %15, %16 : vector<12x4xf32>
    %18 = vector.extract_strided_slice %3 {offsets = [0, 2], sizes = [12, 1], strides = [1, 1]} : vector<12x4xf32> to vector<12x1xf32>
    %19 = vector.extract_strided_slice %6 {offsets = [2, 0], sizes = [1, 4], strides = [1, 1]} : vector<4x4xf32> to vector<1x4xf32>
    %20 = vector.broadcast %18 : vector<12x1xf32> to vector<12x4xf32>
    %21 = vector.broadcast %19 : vector<1x4xf32> to vector<12x4xf32>
    %22 = arith.mulf %20, %21 : vector<12x4xf32>
    %23 = vector.extract_strided_slice %3 {offsets = [0, 3], sizes = [12, 1], strides = [1, 1]} : vector<12x4xf32> to vector<12x1xf32>
    %24 = vector.extract_strided_slice %6 {offsets = [3, 0], sizes = [1, 4], strides = [1, 1]} : vector<4x4xf32> to vector<1x4xf32>
    %25 = vector.broadcast %23 : vector<12x1xf32> to vector<12x4xf32>
    %26 = vector.broadcast %24 : vector<1x4xf32> to vector<12x4xf32>
    %27 = arith.mulf %25, %26 : vector<12x4xf32>
    %28 = arith.addf %12, %17 : vector<12x4xf32>
    %29 = arith.addf %22, %27 : vector<12x4xf32>
    %30 = arith.addf %28, %29 : vector<12x4xf32>
    %31 = vector.extract_strided_slice %1 {offsets = [0, 0], sizes = [12, 1], strides = [1, 1]} : vector<12x12xf32> to vector<12x1xf32>
    %32 = vector.extract_strided_slice %30 {offsets = [0, 0], sizes = [1, 4], strides = [1, 1]} : vector<12x4xf32> to vector<1x4xf32>
    %33 = vector.broadcast %31 : vector<12x1xf32> to vector<12x4xf32>
    %34 = vector.broadcast %32 : vector<1x4xf32> to vector<12x4xf32>
    %35 = arith.mulf %33, %34 : vector<12x4xf32>
    %36 = vector.extract_strided_slice %1 {offsets = [0, 1], sizes = [12, 1], strides = [1, 1]} : vector<12x12xf32> to vector<12x1xf32>
    %37 = vector.extract_strided_slice %30 {offsets = [1, 0], sizes = [1, 4], strides = [1, 1]} : vector<12x4xf32> to vector<1x4xf32>
    %38 = vector.broadcast %36 : vector<12x1xf32> to vector<12x4xf32>
    %39 = vector.broadcast %37 : vector<1x4xf32> to vector<12x4xf32>
    %40 = arith.mulf %38, %39 : vector<12x4xf32>
    %41 = vector.extract_strided_slice %1 {offsets = [0, 2], sizes = [12, 1], strides = [1, 1]} : vector<12x12xf32> to vector<12x1xf32>
    %42 = vector.extract_strided_slice %30 {offsets = [2, 0], sizes = [1, 4], strides = [1, 1]} : vector<12x4xf32> to vector<1x4xf32>
    %43 = vector.broadcast %41 : vector<12x1xf32> to vector<12x4xf32>
    %44 = vector.broadcast %42 : vector<1x4xf32> to vector<12x4xf32>
    %45 = arith.mulf %43, %44 : vector<12x4xf32>
    %46 = vector.extract_strided_slice %1 {offsets = [0, 3], sizes = [12, 1], strides = [1, 1]} : vector<12x12xf32> to vector<12x1xf32>
    %47 = vector.extract_strided_slice %30 {offsets = [3, 0], sizes = [1, 4], strides = [1, 1]} : vector<12x4xf32> to vector<1x4xf32>
    %48 = vector.broadcast %46 : vector<12x1xf32> to vector<12x4xf32>
    %49 = vector.broadcast %47 : vector<1x4xf32> to vector<12x4xf32>
    %50 = arith.mulf %48, %49 : vector<12x4xf32>
    %51 = vector.extract_strided_slice %1 {offsets = [0, 4], sizes = [12, 1], strides = [1, 1]} : vector<12x12xf32> to vector<12x1xf32>
    %52 = vector.extract_strided_slice %30 {offsets = [4, 0], sizes = [1, 4], strides = [1, 1]} : vector<12x4xf32> to vector<1x4xf32>
    %53 = vector.broadcast %51 : vector<12x1xf32> to vector<12x4xf32>
    %54 = vector.broadcast %52 : vector<1x4xf32> to vector<12x4xf32>
    %55 = arith.mulf %53, %54 : vector<12x4xf32>
    %56 = vector.extract_strided_slice %1 {offsets = [0, 5], sizes = [12, 1], strides = [1, 1]} : vector<12x12xf32> to vector<12x1xf32>
    %57 = vector.extract_strided_slice %30 {offsets = [5, 0], sizes = [1, 4], strides = [1, 1]} : vector<12x4xf32> to vector<1x4xf32>
    %58 = vector.broadcast %56 : vector<12x1xf32> to vector<12x4xf32>
    %59 = vector.broadcast %57 : vector<1x4xf32> to vector<12x4xf32>
    %60 = arith.mulf %58, %59 : vector<12x4xf32>
    %61 = vector.extract_strided_slice %1 {offsets = [0, 6], sizes = [12, 1], strides = [1, 1]} : vector<12x12xf32> to vector<12x1xf32>
    %62 = vector.extract_strided_slice %30 {offsets = [6, 0], sizes = [1, 4], strides = [1, 1]} : vector<12x4xf32> to vector<1x4xf32>
    %63 = vector.broadcast %61 : vector<12x1xf32> to vector<12x4xf32>
    %64 = vector.broadcast %62 : vector<1x4xf32> to vector<12x4xf32>
    %65 = arith.mulf %63, %64 : vector<12x4xf32>
    %66 = vector.extract_strided_slice %1 {offsets = [0, 7], sizes = [12, 1], strides = [1, 1]} : vector<12x12xf32> to vector<12x1xf32>
    %67 = vector.extract_strided_slice %30 {offsets = [7, 0], sizes = [1, 4], strides = [1, 1]} : vector<12x4xf32> to vector<1x4xf32>
    %68 = vector.broadcast %66 : vector<12x1xf32> to vector<12x4xf32>
    %69 = vector.broadcast %67 : vector<1x4xf32> to vector<12x4xf32>
    %70 = arith.mulf %68, %69 : vector<12x4xf32>
    %71 = vector.extract_strided_slice %1 {offsets = [0, 8], sizes = [12, 1], strides = [1, 1]} : vector<12x12xf32> to vector<12x1xf32>
    %72 = vector.extract_strided_slice %30 {offsets = [8, 0], sizes = [1, 4], strides = [1, 1]} : vector<12x4xf32> to vector<1x4xf32>
    %73 = vector.broadcast %71 : vector<12x1xf32> to vector<12x4xf32>
    %74 = vector.broadcast %72 : vector<1x4xf32> to vector<12x4xf32>
    %75 = arith.mulf %73, %74 : vector<12x4xf32>
    %76 = vector.extract_strided_slice %1 {offsets = [0, 9], sizes = [12, 1], strides = [1, 1]} : vector<12x12xf32> to vector<12x1xf32>
    %77 = vector.extract_strided_slice %30 {offsets = [9, 0], sizes = [1, 4], strides = [1, 1]} : vector<12x4xf32> to vector<1x4xf32>
    %78 = vector.broadcast %76 : vector<12x1xf32> to vector<12x4xf32>
    %79 = vector.broadcast %77 : vector<1x4xf32> to vector<12x4xf32>
    %80 = arith.mulf %78, %79 : vector<12x4xf32>
    %81 = vector.extract_strided_slice %1 {offsets = [0, 10], sizes = [12, 1], strides = [1, 1]} : vector<12x12xf32> to vector<12x1xf32>
    %82 = vector.extract_strided_slice %30 {offsets = [10, 0], sizes = [1, 4], strides = [1, 1]} : vector<12x4xf32> to vector<1x4xf32>
    %83 = vector.broadcast %81 : vector<12x1xf32> to vector<12x4xf32>
    %84 = vector.broadcast %82 : vector<1x4xf32> to vector<12x4xf32>
    %85 = arith.mulf %83, %84 : vector<12x4xf32>
    %86 = vector.extract_strided_slice %1 {offsets = [0, 11], sizes = [12, 1], strides = [1, 1]} : vector<12x12xf32> to vector<12x1xf32>
    %87 = vector.extract_strided_slice %30 {offsets = [11, 0], sizes = [1, 4], strides = [1, 1]} : vector<12x4xf32> to vector<1x4xf32>
    %88 = vector.broadcast %86 : vector<12x1xf32> to vector<12x4xf32>
    %89 = vector.broadcast %87 : vector<1x4xf32> to vector<12x4xf32>
    %90 = arith.mulf %88, %89 : vector<12x4xf32>
    %91 = arith.addf %35, %40 : vector<12x4xf32>
    %92 = arith.addf %45, %50 : vector<12x4xf32>
    %93 = arith.addf %55, %60 : vector<12x4xf32>
    %94 = arith.addf %65, %70 : vector<12x4xf32>
    %95 = arith.addf %75, %80 : vector<12x4xf32>
    %96 = arith.addf %85, %90 : vector<12x4xf32>
    %97 = arith.addf %91, %92 : vector<12x4xf32>
    %98 = arith.addf %93, %94 : vector<12x4xf32>
    %99 = arith.addf %95, %96 : vector<12x4xf32>
    %100 = arith.addf %97, %98 : vector<12x4xf32>
    %101 = arith.addf %100, %99 : vector<12x4xf32>
    %102 = vector.broadcast %7 : vector<1x4xf32> to vector<12x4xf32>
    %103 = arith.addf %101, %102 : vector<12x4xf32>
    %cst = arith.constant 0.000000e+00 : f32
    %104 = vector.broadcast %cst : f32 to vector<12x4xf32>
    %105 = arith.maximumf %103, %104 : vector<12x4xf32>
    %106 = arith.addf %105, %3 : vector<12x4xf32>
    %107 = vector.extract_strided_slice %5 {offsets = [0, 0], sizes = [8, 1], strides = [1, 1]} : vector<8x12xf32> to vector<8x1xf32>
    %108 = vector.extract_strided_slice %106 {offsets = [0, 0], sizes = [1, 4], strides = [1, 1]} : vector<12x4xf32> to vector<1x4xf32>
    %109 = vector.broadcast %107 : vector<8x1xf32> to vector<8x4xf32>
    %110 = vector.broadcast %108 : vector<1x4xf32> to vector<8x4xf32>
    %111 = arith.mulf %109, %110 : vector<8x4xf32>
    %112 = vector.extract_strided_slice %5 {offsets = [0, 1], sizes = [8, 1], strides = [1, 1]} : vector<8x12xf32> to vector<8x1xf32>
    %113 = vector.extract_strided_slice %106 {offsets = [1, 0], sizes = [1, 4], strides = [1, 1]} : vector<12x4xf32> to vector<1x4xf32>
    %114 = vector.broadcast %112 : vector<8x1xf32> to vector<8x4xf32>
    %115 = vector.broadcast %113 : vector<1x4xf32> to vector<8x4xf32>
    %116 = arith.mulf %114, %115 : vector<8x4xf32>
    %117 = vector.extract_strided_slice %5 {offsets = [0, 2], sizes = [8, 1], strides = [1, 1]} : vector<8x12xf32> to vector<8x1xf32>
    %118 = vector.extract_strided_slice %106 {offsets = [2, 0], sizes = [1, 4], strides = [1, 1]} : vector<12x4xf32> to vector<1x4xf32>
    %119 = vector.broadcast %117 : vector<8x1xf32> to vector<8x4xf32>
    %120 = vector.broadcast %118 : vector<1x4xf32> to vector<8x4xf32>
    %121 = arith.mulf %119, %120 : vector<8x4xf32>
    %122 = vector.extract_strided_slice %5 {offsets = [0, 3], sizes = [8, 1], strides = [1, 1]} : vector<8x12xf32> to vector<8x1xf32>
    %123 = vector.extract_strided_slice %106 {offsets = [3, 0], sizes = [1, 4], strides = [1, 1]} : vector<12x4xf32> to vector<1x4xf32>
    %124 = vector.broadcast %122 : vector<8x1xf32> to vector<8x4xf32>
    %125 = vector.broadcast %123 : vector<1x4xf32> to vector<8x4xf32>
    %126 = arith.mulf %124, %125 : vector<8x4xf32>
    %127 = vector.extract_strided_slice %5 {offsets = [0, 4], sizes = [8, 1], strides = [1, 1]} : vector<8x12xf32> to vector<8x1xf32>
    %128 = vector.extract_strided_slice %106 {offsets = [4, 0], sizes = [1, 4], strides = [1, 1]} : vector<12x4xf32> to vector<1x4xf32>
    %129 = vector.broadcast %127 : vector<8x1xf32> to vector<8x4xf32>
    %130 = vector.broadcast %128 : vector<1x4xf32> to vector<8x4xf32>
    %131 = arith.mulf %129, %130 : vector<8x4xf32>
    %132 = vector.extract_strided_slice %5 {offsets = [0, 5], sizes = [8, 1], strides = [1, 1]} : vector<8x12xf32> to vector<8x1xf32>
    %133 = vector.extract_strided_slice %106 {offsets = [5, 0], sizes = [1, 4], strides = [1, 1]} : vector<12x4xf32> to vector<1x4xf32>
    %134 = vector.broadcast %132 : vector<8x1xf32> to vector<8x4xf32>
    %135 = vector.broadcast %133 : vector<1x4xf32> to vector<8x4xf32>
    %136 = arith.mulf %134, %135 : vector<8x4xf32>
    %137 = vector.extract_strided_slice %5 {offsets = [0, 6], sizes = [8, 1], strides = [1, 1]} : vector<8x12xf32> to vector<8x1xf32>
    %138 = vector.extract_strided_slice %106 {offsets = [6, 0], sizes = [1, 4], strides = [1, 1]} : vector<12x4xf32> to vector<1x4xf32>
    %139 = vector.broadcast %137 : vector<8x1xf32> to vector<8x4xf32>
    %140 = vector.broadcast %138 : vector<1x4xf32> to vector<8x4xf32>
    %141 = arith.mulf %139, %140 : vector<8x4xf32>
    %142 = vector.extract_strided_slice %5 {offsets = [0, 7], sizes = [8, 1], strides = [1, 1]} : vector<8x12xf32> to vector<8x1xf32>
    %143 = vector.extract_strided_slice %106 {offsets = [7, 0], sizes = [1, 4], strides = [1, 1]} : vector<12x4xf32> to vector<1x4xf32>
    %144 = vector.broadcast %142 : vector<8x1xf32> to vector<8x4xf32>
    %145 = vector.broadcast %143 : vector<1x4xf32> to vector<8x4xf32>
    %146 = arith.mulf %144, %145 : vector<8x4xf32>
    %147 = vector.extract_strided_slice %5 {offsets = [0, 8], sizes = [8, 1], strides = [1, 1]} : vector<8x12xf32> to vector<8x1xf32>
    %148 = vector.extract_strided_slice %106 {offsets = [8, 0], sizes = [1, 4], strides = [1, 1]} : vector<12x4xf32> to vector<1x4xf32>
    %149 = vector.broadcast %147 : vector<8x1xf32> to vector<8x4xf32>
    %150 = vector.broadcast %148 : vector<1x4xf32> to vector<8x4xf32>
    %151 = arith.mulf %149, %150 : vector<8x4xf32>
    %152 = vector.extract_strided_slice %5 {offsets = [0, 9], sizes = [8, 1], strides = [1, 1]} : vector<8x12xf32> to vector<8x1xf32>
    %153 = vector.extract_strided_slice %106 {offsets = [9, 0], sizes = [1, 4], strides = [1, 1]} : vector<12x4xf32> to vector<1x4xf32>
    %154 = vector.broadcast %152 : vector<8x1xf32> to vector<8x4xf32>
    %155 = vector.broadcast %153 : vector<1x4xf32> to vector<8x4xf32>
    %156 = arith.mulf %154, %155 : vector<8x4xf32>
    %157 = vector.extract_strided_slice %5 {offsets = [0, 10], sizes = [8, 1], strides = [1, 1]} : vector<8x12xf32> to vector<8x1xf32>
    %158 = vector.extract_strided_slice %106 {offsets = [10, 0], sizes = [1, 4], strides = [1, 1]} : vector<12x4xf32> to vector<1x4xf32>
    %159 = vector.broadcast %157 : vector<8x1xf32> to vector<8x4xf32>
    %160 = vector.broadcast %158 : vector<1x4xf32> to vector<8x4xf32>
    %161 = arith.mulf %159, %160 : vector<8x4xf32>
    %162 = vector.extract_strided_slice %5 {offsets = [0, 11], sizes = [8, 1], strides = [1, 1]} : vector<8x12xf32> to vector<8x1xf32>
    %163 = vector.extract_strided_slice %106 {offsets = [11, 0], sizes = [1, 4], strides = [1, 1]} : vector<12x4xf32> to vector<1x4xf32>
    %164 = vector.broadcast %162 : vector<8x1xf32> to vector<8x4xf32>
    %165 = vector.broadcast %163 : vector<1x4xf32> to vector<8x4xf32>
    %166 = arith.mulf %164, %165 : vector<8x4xf32>
    %167 = arith.addf %111, %116 : vector<8x4xf32>
    %168 = arith.addf %121, %126 : vector<8x4xf32>
    %169 = arith.addf %131, %136 : vector<8x4xf32>
    %170 = arith.addf %141, %146 : vector<8x4xf32>
    %171 = arith.addf %151, %156 : vector<8x4xf32>
    %172 = arith.addf %161, %166 : vector<8x4xf32>
    %173 = arith.addf %167, %168 : vector<8x4xf32>
    %174 = arith.addf %169, %170 : vector<8x4xf32>
    %175 = arith.addf %171, %172 : vector<8x4xf32>
    %176 = arith.addf %173, %174 : vector<8x4xf32>
    %177 = arith.addf %176, %175 : vector<8x4xf32>
    %c0_9 = arith.constant 0 : index
    %c0_10 = arith.constant 0 : index
    %178 = vector.load %arg3[%c0_9, %c0_10] : memref<8x4xf32, #tpu.memory_space<vmem>>, vector<8x4xf32>
    tpu.vector_store %arg3[%c0_9, %c0_10], %177 {strides = array<i32>} : memref<8x4xf32, #tpu.memory_space<vmem>>, vector<8x4xf32>,
    return
  }
  func.func @transform_0(%arg0: i32) -> (i32, i32, i32) {
    %c0_i32 = arith.constant 0 : i32
    %c0_i32_0 = arith.constant 0 : i32
    %c0_i32_1 = arith.constant 0 : i32
    return %arg0, %c0_i32, %c0_i32_0 : i32, i32, i32
  }
  func.func @transform_1(%arg0: i32) -> (i32, i32) {
    %c0_i32 = arith.constant 0 : i32
    %c0_i32_0 = arith.constant 0 : i32
    %c0_i32_1 = arith.constant 0 : i32
    return %c0_i32, %c0_i32_0 : i32, i32
  }
  func.func @transform_2(%arg0: i32) -> (i32, i32) {
    %c0_i32 = arith.constant 0 : i32
    %c0_i32_0 = arith.constant 0 : i32
    return %arg0, %c0_i32 : i32, i32
  }
}

</mosaic_0001>

<llo_original>
// kernel: tpu_custom_call.1
$region0: #{tpu_custom_call.1}
  #allocation0 [shape = 'u32[]', space=smem, size = 0x4, offset = 0x4, fixed_abs, tag = 'smem constant byte address 0x4 - core index']
  #allocation1 [shape = 'u32[144,128]{1,0:T(1,128)}', space=vmem, size = 0x12000, scoped, tag = 'internal scratch']
  %s0 = inlined_call_operand.vmem [shape: f32[4,40,12], index: 0, kind: input, shape index: {}]
  %s1 = inlined_call_operand.vmem [shape: f32[88,32], index: 1, kind: input, shape index: {}]
  %s2 = inlined_call_operand.vmem [shape: f32[32,4], index: 2, kind: output, shape index: {}]
  %s3 = sld [smem:[#allocation0]]
  $region41: #{tpu_custom_call.1} parent=0
    _
  %s5 = ssub.s32 1, %s3
  %s6 = scalar_select 0, %s5, %s3
  loop: start=0, step=1, limit=6
  $region2: #{tpu_custom_call.1} parent=0 // loop_pre_header
    _
  $region3: #{tpu_custom_call.1} parent=0 // loop_header
    %s8 = sphi 0, %s12
    %p9 = scmp.ge.s32.totalorder %s8, 6
    %s18 = sphi 0, %s20
    %s21 = sphi 0, %s18
    %s22 = sphi 0, %s21
    %s38 = sphi 0, %s22
    %s42 = sphi 0, %s42
    %s44 = sphi 0, %s42
    %s45 = sphi 0, %s44
    %s59 = sphi 0, %s45
    %s65 = sphi 0, %s67
    %s68 = sphi 0, %s65
    %s69 = sphi 0, %s68
    %s85 = sphi 0, %s69
  $region4: #{tpu_custom_call.1} parent=0 // loop_header_branch
    %11 = sbr.rel (%p9) target = $region8
  $region5: #{tpu_custom_call.1} parent=0 // loop_body
    %s13 = ssub.s32 %s8, 1
    %s14 = ssub.s32 %s8, 2
    %s15 = sadd.s32 %s8, 1
    %s16 = ssub.s32 %s8, %s15
    %p17 = scmp.eq.s32.totalorder %s16, 0
    %s19 = sadd.s32 %s18, 1
    %s20 = scalar_select %p17, %s18, %s19
    %p23 = pneg %p17
    %p24 = scmp.eq.s32.totalorder %s8, 3
    %p25 = por %p23, %p24
    %p26 = scmp.ne.s32.totalorder %s18, %s21
    %p27 = scmp.eq.s32.totalorder %s8, 0
    %p28 = por %p26, %p27
    %p29 = scmp.ne.s32.totalorder %s18, %s21
    %p30 = scmp.eq.s32.totalorder %s13, 3
    %p31 = por %p29, %p30
    %p32 = scmp.ne.s32.totalorder %s21, %s22
    %p33 = scmp.eq.s32.totalorder %s13, 0
    %p34 = por %p32, %p33
    %p35 = scmp.ne.s32.totalorder %s21, %s22
    %p36 = scmp.eq.s32.totalorder %s14, 3
    %p37 = por %p35, %p36
    %p39 = scmp.ne.s32.totalorder %s22, %s38
    %p40 = scmp.eq.s32.totalorder %s14, 0
    %p41 = por %p39, %p40
    %s43 = sadd.s32 %s42, 1
    %p46 = scmp.eq.s32.totalorder %s8, 3
    %p47 = scmp.ne.s32.totalorder %s42, %s44
    %p48 = scmp.eq.s32.totalorder %s8, 0
    %p49 = por %p47, %p48
    %p50 = scmp.ne.s32.totalorder %s42, %s44
    %p51 = scmp.eq.s32.totalorder %s13, 3
    %p52 = por %p50, %p51
    %p53 = scmp.ne.s32.totalorder %s44, %s45
    %p54 = scmp.eq.s32.totalorder %s13, 0
    %p55 = por %p53, %p54
    %p56 = scmp.ne.s32.totalorder %s44, %s45
    %p57 = scmp.eq.s32.totalorder %s14, 3
    %p58 = por %p56, %p57
    %p60 = scmp.ne.s32.totalorder %s45, %s59
    %p61 = scmp.eq.s32.totalorder %s14, 0
    %p62 = por %p60, %p61
    %s63 = ssub.s32 %s8, %s15
    %p64 = scmp.eq.s32.totalorder %s63, 0
    %s66 = sadd.s32 %s65, 1
    %s67 = scalar_select %p64, %s65, %s66
    %p70 = pneg %p64
    %p71 = scmp.eq.s32.totalorder %s8, 3
    %p72 = por %p70, %p71
    %p73 = scmp.ne.s32.totalorder %s65, %s68
    %p74 = scmp.eq.s32.totalorder %s8, 0
    %p75 = por %p73, %p74
    %p76 = scmp.ne.s32.totalorder %s65, %s68
    %p77 = scmp.eq.s32.totalorder %s13, 3
    %p78 = por %p76, %p77
    %p79 = scmp.ne.s32.totalorder %s68, %s69
    %p80 = scmp.eq.s32.totalorder %s13, 0
    %p81 = por %p79, %p80
    %p82 = scmp.ne.s32.totalorder %s68, %s69
    %p83 = scmp.eq.s32.totalorder %s14, 3
    %p84 = por %p82, %p83
    %p86 = scmp.ne.s32.totalorder %s69, %s85
    %p87 = scmp.eq.s32.totalorder %s14, 0
    %p88 = por %p86, %p87
    %p89 = scmp.le.s32.totalorder 1, %s8
    %p90 = scmp.lt.s32.totalorder %s8, 5
    %p91 = pnand %p89, %p90
    %p92 = pneg %p91
    // Predicated region
    $region9: #{tpu_custom_call.1} parent=5 // pred_check
      _
    $region10: #{tpu_custom_call.1} parent=5 // pred_check_branch
      %94 = sbr.rel (%p91) target = $region12
    $region11: #{tpu_custom_call.1} parent=5 // pred_region
      %s95 = ssub.s32 %s8, 1
      // Predicated region
      $region13: #{tpu_custom_call.1} parent=11 // pred_check
        %p96 = pneg %p55
      $region14: #{tpu_custom_call.1} parent=11 // pred_check_branch
        %98 = sbr.rel (%p96) target = $region16
      $region15: #{tpu_custom_call.1} parent=11 // pred_region
        _
      $region16: #{tpu_custom_call.1} parent=11 // pred_fallthru
        _
    $region12: #{tpu_custom_call.1} parent=5 // pred_fallthru
      _
    %p99 = scmp.lt.s32.totalorder %s8, 4
    // Predicated region
    $region17: #{tpu_custom_call.1} parent=5 // pred_check
      %p100 = pneg %p99
    $region18: #{tpu_custom_call.1} parent=5 // pred_check_branch
      %102 = sbr.rel (%p100) target = $region20
    $region19: #{tpu_custom_call.1} parent=5 // pred_region
      // Predicated region
      $region21: #{tpu_custom_call.1} parent=19 // pred_check
        %p103 = pneg %p28
      $region22: #{tpu_custom_call.1} parent=19 // pred_check_branch
        %105 = sbr.rel (%p103) target = $region24
      $region23: #{tpu_custom_call.1} parent=19 // pred_region
        %p106 = scmp.lt.s32.totalorder %s8, 3
        %s107 = scalar_select %p106, %s8, 3
        %s108 = smul.addr %s107, 5
        %s109 = smul.addr %s108, 8
        %s110 = scalar_lea.vmem %s0, %s109
      $region24: #{tpu_custom_call.1} parent=19 // pred_fallthru
        _
    $region20: #{tpu_custom_call.1} parent=5 // pred_fallthru
      _
    %p111 = scmp.le.s32.totalorder 1, %s8
    %p112 = scmp.lt.s32.totalorder %s8, 5
    %p113 = pnand %p111, %p112
    %p114 = pneg %p113
    // Predicated region
    $region25: #{tpu_custom_call.1} parent=5 // pred_check
      _
    $region26: #{tpu_custom_call.1} parent=5 // pred_check_branch
      %116 = sbr.rel (%p113) target = $region28
    $region27: #{tpu_custom_call.1} parent=5 // pred_region
      %s117 = ssub.s32 %s8, 1
      %p118 = scmp.lt.s32.totalorder %s13, 3
      %s119 = scalar_select %p118, %s13, 3
      %s120 = smul.addr %s119, 5
      %s121 = smul.addr %s120, 8
      %s122 = scalar_lea.vmem %s0, %s121
      %p123 = pneg %p34
      %p124 = pneg %p31
      %p125 = pneg %p55
      %p126 = pneg %p52
      %p127 = pneg %p81
      %p128 = pneg %p78
      %p129 = scmp.lt.s32.totalorder %s13, 3
      %s130 = scalar_select %p129, %s13, 3
      %s131 = smul.addr %s130, 8
      %s132 = scalar_lea.vmem %s2, %s131
      %p133 = scmp.lt.s32.totalorder %s13, 3
      %s134 = scalar_select %p133, %s13, 3
      %s135 = smul.addr %s134, 5
      %s136 = smul.addr %s135, 8
      %s137 = scalar_lea.vmem %s0, %s136
      %p138 = scmp.lt.s32.totalorder %s13, 3
      %s139 = scalar_select %p138, %s13, 3
      %s140 = smul.addr %s139, 8
      %s141 = scalar_lea.vmem %s2, %s140
      %v142 = vld [vmem:[%s137] sm:$0xff]
      %v143 = vld [vmem:[%s137 + $0x8] sm:$0xf]
      %v144 = vld [vmem:[%s137 + $0x10] sm:$0xff]
      %v145 = vld [vmem:[%s137 + $0x18] sm:$0xf]
      %v146 = vld [vmem:[%s137 + $0x20] sm:$0xff]
      %v147 = vld [vmem:[%s1] sm:$0xf]
      %v148 = vld [vmem:[%s1 + $0x8] sm:$0x1]
      %150 = vset.pattern.permute.xlu0 0
      %151 = vperm.xlu0 %150, %v144
      %v152 = vpop.permute.xlu0 %151
      %155 = vset.pattern.permute.xlu0 0
      %156 = vperm.xlu0 %155, %v145
      %v157 = vpop.permute.xlu0 %156
      %v159 = vlaneseq
      %v160 = vshrl.u32 %v159, 7
      %v161 = vsub.s32 0, %v160
      %v162 = vrot.slane %v147, %v161
      %v163 = vmul.f32 %v152, %v162
      %v164 = vmul.f32 %v157, %v162
      %165 = vset.pattern.permute.xlu0 1
      %166 = vperm.xlu0 %165, %v144
      %v167 = vpop.permute.xlu0 %166
      %169 = vset.pattern.permute.xlu0 1
      %170 = vperm.xlu0 %169, %v145
      %v171 = vpop.permute.xlu0 %170
      %v173 = vlaneseq
      %v174 = vshrl.u32 %v173, 7
      %v175 = vsub.s32 1, %v174
      %v176 = vrot.slane %v147, %v175
      %v177 = vmul.f32 %v167, %v176
      %v178 = vmul.f32 %v171, %v176
      %179 = vset.pattern.permute.xlu0 2
      %180 = vperm.xlu0 %179, %v144
      %v181 = vpop.permute.xlu0 %180
      %183 = vset.pattern.permute.xlu0 2
      %184 = vperm.xlu0 %183, %v145
      %v185 = vpop.permute.xlu0 %184
      %v187 = vlaneseq
      %v188 = vshrl.u32 %v187, 7
      %v189 = vsub.s32 2, %v188
      %v190 = vrot.slane %v147, %v189
      %v191 = vmul.f32 %v181, %v190
      %v192 = vmul.f32 %v185, %v190
      %193 = vset.pattern.permute.xlu0 3
      %194 = vperm.xlu0 %193, %v144
      %v195 = vpop.permute.xlu0 %194
      %197 = vset.pattern.permute.xlu0 3
      %198 = vperm.xlu0 %197, %v145
      %v199 = vpop.permute.xlu0 %198
      %v201 = vlaneseq
      %v202 = vshrl.u32 %v201, 7
      %v203 = vsub.s32 3, %v202
      %v204 = vrot.slane %v147, %v203
      %v205 = vmul.f32 %v195, %v204
      %v206 = vmul.f32 %v199, %v204
      %v207 = vadd.f32 %v163, %v177
      %v208 = vadd.f32 %v164, %v178
      %v209 = vadd.f32 %v191, %v205
      %v210 = vadd.f32 %v192, %v206
      %v211 = vadd.f32 %v207, %v209
      %v212 = vadd.f32 %v208, %v210
      %214 = vset.pattern.permute.xlu0 0
      %215 = vperm.xlu0 %214, %v142
      %v216 = vpop.permute.xlu0 %215
      %219 = vset.pattern.permute.xlu0 0
      %220 = vperm.xlu0 %219, %v143
      %v221 = vpop.permute.xlu0 %220
      %v223 = vlaneseq
      %v224 = vshrl.u32 %v223, 7
      %v225 = vsub.s32 0, %v224
      %v226 = vrot.slane %v211, %v225
      %v227 = vmul.f32 %v216, %v226
      %v228 = vmul.f32 %v221, %v226
      %229 = vset.pattern.permute.xlu0 1
      %230 = vperm.xlu0 %229, %v142
      %v231 = vpop.permute.xlu0 %230
      %233 = vset.pattern.permute.xlu0 1
      %234 = vperm.xlu0 %233, %v143
      %v235 = vpop.permute.xlu0 %234
      %v237 = vlaneseq
      %v238 = vshrl.u32 %v237, 7
      %v239 = vsub.s32 1, %v238
      %v240 = vrot.slane %v211, %v239
      %v241 = vmul.f32 %v231, %v240
      %v242 = vmul.f32 %v235, %v240
      %243 = vset.pattern.permute.xlu0 2
      %244 = vperm.xlu0 %243, %v142
      %v245 = vpop.permute.xlu0 %244
      %247 = vset.pattern.permute.xlu0 2
      %248 = vperm.xlu0 %247, %v143
      %v249 = vpop.permute.xlu0 %248
      %v251 = vlaneseq
      %v252 = vshrl.u32 %v251, 7
      %v253 = vsub.s32 2, %v252
      %v254 = vrot.slane %v211, %v253
      %v255 = vmul.f32 %v245, %v254
      %v256 = vmul.f32 %v249, %v254
      %257 = vset.pattern.permute.xlu0 3
      %258 = vperm.xlu0 %257, %v142
      %v259 = vpop.permute.xlu0 %258
      %261 = vset.pattern.permute.xlu0 3
      %262 = vperm.xlu0 %261, %v143
      %v263 = vpop.permute.xlu0 %262
      %v265 = vlaneseq
      %v266 = vshrl.u32 %v265, 7
      %v267 = vsub.s32 3, %v266
      %v268 = vrot.slane %v211, %v267
      %v269 = vmul.f32 %v259, %v268
      %v270 = vmul.f32 %v263, %v268
      %271 = vset.pattern.permute.xlu0 4
      %272 = vperm.xlu0 %271, %v142
      %v273 = vpop.permute.xlu0 %272
      %275 = vset.pattern.permute.xlu0 4
      %276 = vperm.xlu0 %275, %v143
      %v277 = vpop.permute.xlu0 %276
      %v279 = vlaneseq
      %v280 = vshrl.u32 %v279, 7
      %v281 = vsub.s32 4, %v280
      %v282 = vrot.slane %v211, %v281
      %v283 = vmul.f32 %v273, %v282
      %v284 = vmul.f32 %v277, %v282
      %285 = vset.pattern.permute.xlu0 5
      %286 = vperm.xlu0 %285, %v142
      %v287 = vpop.permute.xlu0 %286
      %289 = vset.pattern.permute.xlu0 5
      %290 = vperm.xlu0 %289, %v143
      %v291 = vpop.permute.xlu0 %290
      %v293 = vlaneseq
      %v294 = vshrl.u32 %v293, 7
      %v295 = vsub.s32 5, %v294
      %v296 = vrot.slane %v211, %v295
      %v297 = vmul.f32 %v287, %v296
      %v298 = vmul.f32 %v291, %v296
      %299 = vset.pattern.permute.xlu0 6
      %300 = vperm.xlu0 %299, %v142
      %v301 = vpop.permute.xlu0 %300
      %303 = vset.pattern.permute.xlu0 6
      %304 = vperm.xlu0 %303, %v143
      %v305 = vpop.permute.xlu0 %304
      %v307 = vlaneseq
      %v308 = vshrl.u32 %v307, 7
      %v309 = vsub.s32 6, %v308
      %v310 = vrot.slane %v211, %v309
      %v311 = vmul.f32 %v301, %v310
      %v312 = vmul.f32 %v305, %v310
      %313 = vset.pattern.permute.xlu0 7
      %314 = vperm.xlu0 %313, %v142
      %v315 = vpop.permute.xlu0 %314
      %317 = vset.pattern.permute.xlu0 7
      %318 = vperm.xlu0 %317, %v143
      %v319 = vpop.permute.xlu0 %318
      %v321 = vlaneseq
      %v322 = vshrl.u32 %v321, 7
      %v323 = vsub.s32 7, %v322
      %v324 = vrot.slane %v211, %v323
      %v325 = vmul.f32 %v315, %v324
      %v326 = vmul.f32 %v319, %v324
      %327 = vset.pattern.permute.xlu0 8
      %328 = vperm.xlu0 %327, %v142
      %v329 = vpop.permute.xlu0 %328
      %331 = vset.pattern.permute.xlu0 8
      %332 = vperm.xlu0 %331, %v143
      %v333 = vpop.permute.xlu0 %332
      %v335 = vlaneseq
      %v336 = vshrl.u32 %v335, 7
      %v337 = vsub.s32 0, %v336
      %v338 = vrot.slane %v212, %v337
      %v339 = vmul.f32 %v329, %v338
      %v340 = vmul.f32 %v333, %v338
      %341 = vset.pattern.permute.xlu0 9
      %342 = vperm.xlu0 %341, %v142
      %v343 = vpop.permute.xlu0 %342
      %345 = vset.pattern.permute.xlu0 9
      %346 = vperm.xlu0 %345, %v143
      %v347 = vpop.permute.xlu0 %346
      %v349 = vlaneseq
      %v350 = vshrl.u32 %v349, 7
      %v351 = vsub.s32 1, %v350
      %v352 = vrot.slane %v212, %v351
      %v353 = vmul.f32 %v343, %v352
      %v354 = vmul.f32 %v347, %v352
      %355 = vset.pattern.permute.xlu0 10
      %356 = vperm.xlu0 %355, %v142
      %v357 = vpop.permute.xlu0 %356
      %359 = vset.pattern.permute.xlu0 10
      %360 = vperm.xlu0 %359, %v143
      %v361 = vpop.permute.xlu0 %360
      %v363 = vlaneseq
      %v364 = vshrl.u32 %v363, 7
      %v365 = vsub.s32 2, %v364
      %v366 = vrot.slane %v212, %v365
      %v367 = vmul.f32 %v357, %v366
      %v368 = vmul.f32 %v361, %v366
      %369 = vset.pattern.permute.xlu0 11
      %370 = vperm.xlu0 %369, %v142
      %v371 = vpop.permute.xlu0 %370
      %373 = vset.pattern.permute.xlu0 11
      %374 = vperm.xlu0 %373, %v143
      %v375 = vpop.permute.xlu0 %374
      %v377 = vlaneseq
      %v378 = vshrl.u32 %v377, 7
      %v379 = vsub.s32 3, %v378
      %v380 = vrot.slane %v212, %v379
      %v381 = vmul.f32 %v371, %v380
      %v382 = vmul.f32 %v375, %v380
      %v383 = vadd.f32 %v227, %v241
      %v384 = vadd.f32 %v228, %v242
      %v385 = vadd.f32 %v255, %v269
      %v386 = vadd.f32 %v256, %v270
      %v387 = vadd.f32 %v283, %v297
      %v388 = vadd.f32 %v284, %v298
      %v389 = vadd.f32 %v311, %v325
      %v390 = vadd.f32 %v312, %v326
      %v391 = vadd.f32 %v339, %v353
      %v392 = vadd.f32 %v340, %v354
      %v393 = vadd.f32 %v367, %v381
      %v394 = vadd.f32 %v368, %v382
      %v395 = vadd.f32 %v383, %v385
      %v396 = vadd.f32 %v384, %v386
      %v397 = vadd.f32 %v387, %v389
      %v398 = vadd.f32 %v388, %v390
      %v399 = vadd.f32 %v391, %v393
      %v400 = vadd.f32 %v392, %v394
      %v401 = vadd.f32 %v395, %v397
      %v402 = vadd.f32 %v396, %v398
      %v403 = vadd.f32 %v401, %v399
      %v404 = vadd.f32 %v402, %v400
      %v405 = vlaneseq
      %v406 = vshrl.u32 %v405, 7
      %v407 = vsub.s32 0, %v406
      %v408 = vrot.slane %v148, %v407
      %v409 = vadd.f32 %v403, %v408
      %v410 = vadd.f32 %v404, %v408
      %v411 = vmax.f32 %v409, 0.0
      %v412 = vmax.f32 %v410, 0.0
      %v413 = vadd.f32 %v411, %v144
      %v414 = vadd.f32 %v412, %v145
      %416 = vset.pattern.permute.xlu0 0
      %417 = vperm.xlu0 %416, %v146
      %v418 = vpop.permute.xlu0 %417
      %v420 = vlaneseq
      %v421 = vshrl.u32 %v420, 7
      %v422 = vsub.s32 0, %v421
      %v423 = vrot.slane %v413, %v422
      %v424 = vmul.f32 %v418, %v423
      %425 = vset.pattern.permute.xlu0 1
      %426 = vperm.xlu0 %425, %v146
      %v427 = vpop.permute.xlu0 %426
      %v429 = vlaneseq
      %v430 = vshrl.u32 %v429, 7
      %v431 = vsub.s32 1, %v430
      %v432 = vrot.slane %v413, %v431
      %v433 = vmul.f32 %v427, %v432
      %434 = vset.pattern.permute.xlu0 2
      %435 = vperm.xlu0 %434, %v146
      %v436 = vpop.permute.xlu0 %435
      %v438 = vlaneseq
      %v439 = vshrl.u32 %v438, 7
      %v440 = vsub.s32 2, %v439
      %v441 = vrot.slane %v413, %v440
      %v442 = vmul.f32 %v436, %v441
      %443 = vset.pattern.permute.xlu0 3
      %444 = vperm.xlu0 %443, %v146
      %v445 = vpop.permute.xlu0 %444
      %v447 = vlaneseq
      %v448 = vshrl.u32 %v447, 7
      %v449 = vsub.s32 3, %v448
      %v450 = vrot.slane %v413, %v449
      %v451 = vmul.f32 %v445, %v450
      %452 = vset.pattern.permute.xlu0 4
      %453 = vperm.xlu0 %452, %v146
      %v454 = vpop.permute.xlu0 %453
      %v456 = vlaneseq
      %v457 = vshrl.u32 %v456, 7
      %v458 = vsub.s32 4, %v457
      %v459 = vrot.slane %v413, %v458
      %v460 = vmul.f32 %v454, %v459
      %461 = vset.pattern.permute.xlu0 5
      %462 = vperm.xlu0 %461, %v146
      %v463 = vpop.permute.xlu0 %462
      %v465 = vlaneseq
      %v466 = vshrl.u32 %v465, 7
      %v467 = vsub.s32 5, %v466
      %v468 = vrot.slane %v413, %v467
      %v469 = vmul.f32 %v463, %v468
      %470 = vset.pattern.permute.xlu0 6
      %471 = vperm.xlu0 %470, %v146
      %v472 = vpop.permute.xlu0 %471
      %v474 = vlaneseq
      %v475 = vshrl.u32 %v474, 7
      %v476 = vsub.s32 6, %v475
      %v477 = vrot.slane %v413, %v476
      %v478 = vmul.f32 %v472, %v477
      %479 = vset.pattern.permute.xlu0 7
      %480 = vperm.xlu0 %479, %v146
      %v481 = vpop.permute.xlu0 %480
      %v483 = vlaneseq
      %v484 = vshrl.u32 %v483, 7
      %v485 = vsub.s32 7, %v484
      %v486 = vrot.slane %v413, %v485
      %v487 = vmul.f32 %v481, %v486
      %488 = vset.pattern.permute.xlu0 8
      %489 = vperm.xlu0 %488, %v146
      %v490 = vpop.permute.xlu0 %489
      %v492 = vlaneseq
      %v493 = vshrl.u32 %v492, 7
      %v494 = vsub.s32 0, %v493
      %v495 = vrot.slane %v414, %v494
      %v496 = vmul.f32 %v490, %v495
      %497 = vset.pattern.permute.xlu0 9
      %498 = vperm.xlu0 %497, %v146
      %v499 = vpop.permute.xlu0 %498
      %v501 = vlaneseq
      %v502 = vshrl.u32 %v501, 7
      %v503 = vsub.s32 1, %v502
      %v504 = vrot.slane %v414, %v503
      %v505 = vmul.f32 %v499, %v504
      %506 = vset.pattern.permute.xlu0 10
      %507 = vperm.xlu0 %506, %v146
      %v508 = vpop.permute.xlu0 %507
      %v510 = vlaneseq
      %v511 = vshrl.u32 %v510, 7
      %v512 = vsub.s32 2, %v511
      %v513 = vrot.slane %v414, %v512
      %v514 = vmul.f32 %v508, %v513
      %515 = vset.pattern.permute.xlu0 11
      %516 = vperm.xlu0 %515, %v146
      %v517 = vpop.permute.xlu0 %516
      %v519 = vlaneseq
      %v520 = vshrl.u32 %v519, 7
      %v521 = vsub.s32 3, %v520
      %v522 = vrot.slane %v414, %v521
      %v523 = vmul.f32 %v517, %v522
      %v524 = vadd.f32 %v424, %v433
      %v525 = vadd.f32 %v442, %v451
      %v526 = vadd.f32 %v460, %v469
      %v527 = vadd.f32 %v478, %v487
      %v528 = vadd.f32 %v496, %v505
      %v529 = vadd.f32 %v514, %v523
      %v530 = vadd.f32 %v524, %v525
      %v531 = vadd.f32 %v526, %v527
      %v532 = vadd.f32 %v528, %v529
      %v533 = vadd.f32 %v530, %v531
      %v534 = vadd.f32 %v533, %v532
      %vm535 = vcmask 31744
      %536 = vst.msk [vmem:[%s141] sm:$0xff] %vm535, %v534
      %p537 = scmp.lt.s32.totalorder %s13, 3
      %s538 = scalar_select %p537, %s13, 3
      %s539 = smul.addr %s538, 8
      %s540 = scalar_lea.vmem %s2, %s539
      // Predicated region
      $region29: #{tpu_custom_call.1} parent=27 // pred_check
        %p541 = pneg %p78
      $region30: #{tpu_custom_call.1} parent=27 // pred_check_branch
        %543 = sbr.rel (%p541) target = $region32
      $region31: #{tpu_custom_call.1} parent=27 // pred_region
        _
      $region32: #{tpu_custom_call.1} parent=27 // pred_fallthru
        _
    $region28: #{tpu_custom_call.1} parent=5 // pred_fallthru
      _
    %p544 = scmp.le.s32.totalorder 2, %s8
    // Predicated region
    $region33: #{tpu_custom_call.1} parent=5 // pred_check
      %p545 = pneg %p544
    $region34: #{tpu_custom_call.1} parent=5 // pred_check_branch
      %547 = sbr.rel (%p545) target = $region36
    $region35: #{tpu_custom_call.1} parent=5 // pred_region
      %s548 = ssub.s32 %s8, 2
      // Predicated region
      $region37: #{tpu_custom_call.1} parent=35 // pred_check
        %p549 = pneg %p84
      $region38: #{tpu_custom_call.1} parent=35 // pred_check_branch
        %551 = sbr.rel (%p549) target = $region40
      $region39: #{tpu_custom_call.1} parent=35 // pred_region
        %p552 = scmp.lt.s32.totalorder %s14, 3
        %s553 = scalar_select %p552, %s14, 3
        %s554 = smul.addr %s553, 8
        %s555 = scalar_lea.vmem %s2, %s554
      $region40: #{tpu_custom_call.1} parent=35 // pred_fallthru
        _
    $region36: #{tpu_custom_call.1} parent=5 // pred_fallthru
      _
  $region6: #{tpu_custom_call.1} parent=0 // loop_footer
    %s12 = sadd.s32 1, %s8
  $region7: #{tpu_custom_call.1} parent=0 // loop_footer_branch
    %7 = sbr.rel target = $region3
  $region8: #{tpu_custom_call.1} parent=0 // loop_exit
    _

</llo_original>
